<compile_context>
chip_gen: v7x
topology: tpu7x:2x2x1
jax: 0.10.0
libtpu: 0.0.40
codegen_flags: <defaults>
</compile_context>

<pallas_src>
import jax
import jax.numpy as jnp
from jax import lax
from jax.experimental import pallas as pl
from jax.experimental.pallas import tpu as pltpu


def _round_up(x, m):
    return (x + m - 1) // m * m


def _vmem_limit_bytes(block_bytes):
    # 2x for default double-buffered streams + headroom; cap below v7x physical.
    return int(min(max(2 * block_bytes + (4 << 20), 16 << 20), 50 << 20))


# ---------------------------------------------------------------------------
# Kernel 1: GraphConv_node  ->  w = relu(feature @ W.T + b), bf16 output
# ---------------------------------------------------------------------------
def _node_linear_kernel(feat_ref, wt_ref, b_ref, out_ref):
    acc = jnp.dot(feat_ref[...], wt_ref[...], preferred_element_type=jnp.float32)
    out_ref[...] = jnp.maximum(acc + b_ref[...], 0.0).astype(out_ref.dtype)


def node_linear_relu(feat_p, wt_p, b_p, *, row_tile):
    N_p, Fn_p = feat_p.shape
    D_p = wt_p.shape[1]
    n_row_tiles = N_p // row_tile
    blk_bytes = (row_tile * Fn_p * 2 + Fn_p * D_p * 2 + D_p * 4 + row_tile * D_p * 2)
    return pl.pallas_call(
        _node_linear_kernel,
        out_shape=jax.ShapeDtypeStruct((N_p, D_p), jnp.bfloat16),
        grid_spec=pltpu.PrefetchScalarGridSpec(
            num_scalar_prefetch=0,
            grid=(n_row_tiles,),
            in_specs=[
                pl.BlockSpec((row_tile, Fn_p), lambda i: (i, 0)),
                pl.BlockSpec((Fn_p, D_p), lambda i: (0, 0)),
                pl.BlockSpec((1, D_p), lambda i: (0, 0)),
            ],
            out_specs=pl.BlockSpec((row_tile, D_p), lambda i: (i, 0)),
        ),
        compiler_params=pltpu.CompilerParams(
            dimension_semantics=("parallel",),
            vmem_limit_bytes=_vmem_limit_bytes(blk_bytes),
        ),
        cost_estimate=pl.CostEstimate(
            flops=int(2 * N_p * Fn_p * D_p),
            transcendentals=0,
            bytes_accessed=int(feat_p.size * 2 + wt_p.size * 2 + b_p.size * 4
                               + N_p * D_p * 2),
        ),
    )(feat_p, wt_p, b_p)


# ---------------------------------------------------------------------------
# Kernel 2: edge apply + u_mul_e + mean-by-dst (dst-sorted edge stream)
# ---------------------------------------------------------------------------
def _message_kernel(lo_ref, hi_ref,                       # scalar prefetch (SMEM)
                    efeat_ref, ewt_ref, eb_ref, wsrc_ref, dst_ref, invdeg_ref,
                    out_ref, acc_sc):
    n = pl.program_id(0)            # node tile (parallel)
    e = pl.program_id(2)            # edge tile (reduction axis, arbitrary)
    TN = acc_sc.shape[0]
    TE = efeat_ref.shape[0]

    @pl.when(e == 0)
    def _init():
        acc_sc[...] = jnp.zeros_like(acc_sc)

    # Edges are sorted by dst: skip the whole edge tile if its destination range
    # does not intersect this node tile (also skips all-padding tiles).
    lo = lo_ref[e]
    hi = hi_ref[e]
    overlap = jnp.logical_and(hi >= n * TN, lo < (n + 1) * TN)

    @pl.when(overlap)
    def _compute():
        # edge linear + ReLU (bf16 MXU, f32 accumulate)
        he = jnp.dot(efeat_ref[...], ewt_ref[...],
                     preferred_element_type=jnp.float32)
        he = jnp.maximum(he + eb_ref[...], 0.0)                       # (TE, TD) f32

        # message: gathered-w (streamed bf16) * h  -> bf16 for the scatter matmul
        m = (wsrc_ref[...].astype(jnp.float32) * he).astype(jnp.bfloat16)

        # tile-local scatter-add: bf16 one-hot (TN, TE) @ (TE, TD), f32 acc.
        rows = lax.broadcasted_iota(jnp.int32, (TN, TE), 0) + n * TN
        dst_oh = (dst_ref[0] == rows).astype(jnp.bfloat16)            # (TN, TE)
        acc_sc[...] += jnp.dot(dst_oh, m, preferred_element_type=jnp.float32)

    @pl.when(e == pl.num_programs(2) - 1)
    def _finalize():
        out_ref[...] = acc_sc[...] * invdeg_ref[...]


def graph_nn_forward(feature, efeature, nweight, nbias, eweight, ebias, src, dst,
                     *, edge_tile=256, node_tile=None, d_tile=None):
    N, Fn = feature.shape
    E, Fe = efeature.shape
    D = nweight.shape[0]
    assert nweight.shape[1] == Fn
    assert eweight.shape == (D, Fe), "u_mul_e requires matching node/edge hidden dims"

    LANE = 128
    Fn_p = _round_up(Fn, LANE)
    Fe_p = _round_up(Fe, LANE)
    D_p = _round_up(D, LANE)

    # Hidden-dim tiling: second parallel grid axis (work for v7x's 2nd core).
    if d_tile is None:
        TD = D_p if D_p <= 256 else 256
    else:
        TD = _round_up(min(d_tile, D_p), LANE)
    D_p = _round_up(D_p, TD)
    d_tiles = D_p // TD

    # Node tiling (16-row multiples for clean bf16 sublane packing).
    N_p = _round_up(N, 16)
    TN = N_p if node_tile is None else _round_up(min(node_tile, N_p), 16)
    N_p = _round_up(N_p, TN)
    n_tiles = N_p // TN

    # Edge tiling: 128-lane multiples -> lane-dense dst loads, big MXU M/K.
    TE = _round_up(min(edge_tile, _round_up(E, LANE)), LANE)
    E_p = _round_up(E, TE)
    e_tiles = E_p // TE

    def pad2(x, r, c, dtype):
        return jnp.pad(x, ((0, r - x.shape[0]), (0, c - x.shape[1]))).astype(dtype)

    # ---- Kernel 1: node projection (GraphConv_node), hoisted out of msg-passing
    feat_p = pad2(feature, N_p, Fn_p, jnp.bfloat16)
    nwt_p = pad2(nweight.T, Fn_p, D_p, jnp.bfloat16)       # F.linear uses x @ W.T
    nb_p = jnp.pad(nbias, (0, D_p - D)).reshape(1, D_p).astype(jnp.float32)
    row_tile = 256 if (N_p > 256 and N_p % 256 == 0) else N_p
    w_bf16 = node_linear_relu(feat_p, nwt_p, nb_p, row_tile=row_tile)  # (N_p, D_p)

    # ---- sort edges by destination (scatter locality + per-tile skip gating)
    order = jnp.argsort(dst)
    src_s = src.astype(jnp.int32)[order]
    dst_s = dst.astype(jnp.int32)[order]
    efeat_s = efeature[order]

    efeat_p = pad2(efeat_s, E_p, Fe_p, jnp.bfloat16)
    ewt_p = pad2(eweight.T, Fe_p, D_p, jnp.bfloat16)
    eb_p = jnp.pad(ebias, (0, D_p - D)).reshape(1, D_p).astype(jnp.float32)

    # O(E*D) XLA gather of the projected node features (replaces the in-kernel
    # O(E*N*D) one-hot gather matmul); streamed into the kernel as bf16 blocks.
    src_pad = jnp.pad(src_s, (0, E_p - E), constant_values=0)
    w_src = jnp.take(w_bf16, src_pad, axis=0)                 # (E_p, D_p) bf16

    # dst ids per edge tile (lane axis); padded edges get -1 -> never scattered.
    dst_pad = jnp.pad(dst_s, (0, E_p - E), constant_values=-1)
    dst_rows = dst_pad.reshape(e_tiles, 1, TE)

    # per-edge-tile dst range, scalar-prefetched to SMEM for the pl.when skip.
    tile_lo = jnp.pad(dst_s, (0, E_p - E), constant_values=N_p
                      ).reshape(e_tiles, TE).min(axis=1).astype(jnp.int32)
    tile_hi = dst_pad.reshape(e_tiles, TE).max(axis=1).astype(jnp.int32)

    # mean normalization: precomputed 1 / in-degree (0-in-degree nodes -> 0 out).
    deg = jnp.zeros((N_p,), jnp.float32).at[dst].add(1.0)
    inv_deg = (1.0 / jnp.maximum(deg, 1.0)).reshape(N_p, 1)

    blk_bytes = (TE * Fe_p * 2 + Fe_p * TD * 2 + TD * 4 + TE * TD * 2
                 + TE * 4 + TN * 4 + TN * TD * 4        # streamed / resident blocks
                 + TN * TD * 4)                         # accumulator scratch
    flops = 2 * n_tiles * E_p * (Fe_p + TN) * D_p
    bytes_accessed = (n_tiles * d_tiles * (efeat_p.size * 2 + dst_rows.size * 4)
                      + n_tiles * w_src.size * 2
                      + ewt_p.size * 2 + eb_p.size * 4
                      + inv_deg.size * 4 + N_p * D_p * 4)

    # TODO(synk): constant-index blocks (ewt, eb, invdeg) still use the default
    # 2-deep pipelining; pl.Buffered(1) would halve their VMEM footprint.
    grid_spec = pltpu.PrefetchScalarGridSpec(
        num_scalar_prefetch=2,
        grid=(n_tiles, d_tiles, e_tiles),
        in_specs=[
            pl.BlockSpec((TE, Fe_p), lambda n, d, e, lo, hi: (e, 0)),     # edge feats
            pl.BlockSpec((Fe_p, TD), lambda n, d, e, lo, hi: (0, d)),     # edge weight
            pl.BlockSpec((1, TD), lambda n, d, e, lo, hi: (0, d)),        # edge bias
            pl.BlockSpec((TE, TD), lambda n, d, e, lo, hi: (e, d)),       # w[src] stream
            pl.BlockSpec((1, 1, TE), lambda n, d, e, lo, hi: (e, 0, 0)),  # dst ids
            pl.BlockSpec((TN, 1), lambda n, d, e, lo, hi: (n, 0)),        # 1/in-degree
        ],
        out_specs=pl.BlockSpec((TN, TD), lambda n, d, e, lo, hi: (n, d)),
        scratch_shapes=[pltpu.VMEM((TN, TD), jnp.float32)],
    )

    out_p = pl.pallas_call(
        _message_kernel,
        out_shape=jax.ShapeDtypeStruct((N_p, D_p), jnp.float32),
        grid_spec=grid_spec,
        compiler_params=pltpu.CompilerParams(
            dimension_semantics=("parallel", "parallel", "arbitrary"),
            vmem_limit_bytes=_vmem_limit_bytes(blk_bytes),
        ),
        cost_estimate=pl.CostEstimate(flops=int(flops), transcendentals=0,
                                      bytes_accessed=int(bytes_accessed)),
    )(tile_lo, tile_hi, efeat_p, ewt_p, eb_p, w_src, dst_rows, inv_deg)

    return out_p[:N, :D]


def _reference(feature, efeature, nweight, nbias, eweight, ebias, src, dst):
    # Mirrors kernel numerics: bf16 linear operands, bf16 w and bf16 messages,
    # f32 accumulation everywhere else.
    N = feature.shape[0]
    bf, f32 = jnp.bfloat16, jnp.float32
    wn = jnp.maximum(
        feature.astype(bf).astype(f32) @ nweight.T.astype(bf).astype(f32) + nbias, 0.0)
    wn = wn.astype(bf).astype(f32)
    he = jnp.maximum(
        efeature.astype(bf).astype(f32) @ eweight.T.astype(bf).astype(f32) + ebias, 0.0)
    m = (wn[src] * he).astype(bf).astype(f32)
    sums = jnp.zeros((N, m.shape[1]), f32).at[dst].add(m)
    cnt = jnp.zeros((N,), f32).at[dst].add(1.0)
    return sums / jnp.maximum(cnt, 1.0)[:, None]


if __name__ == "__main__":
    key = jax.random.PRNGKey(0)
    k_feat, k_efeat, k_nw, k_nb, k_ew, k_eb = jax.random.split(key, 6)

    N, E = 16, 48           # nodes, edges
    Fn, Fe, D = 32, 32, 32  # node feat dim, edge feat dim, hidden dim

    feature = jax.random.normal(k_feat, (N, Fn), jnp.float32)
    efeature = jax.random.normal(k_efeat, (E, Fe), jnp.float32)

    # nn.Linear-style parameters: weight (out, in), bias (out,)
    nweight = jax.random.normal(k_nw, (D, Fn), jnp.float32) * 0.1
    nbias = jax.random.normal(k_nb, (D,), jnp.float32) * 0.1
    eweight = jax.random.normal(k_ew, (D, Fe), jnp.float32) * 0.1
    ebias = jax.random.normal(k_eb, (D,), jnp.float32) * 0.1

    # Deterministic synthetic connectivity (src -> dst)
    src = (jnp.arange(E, dtype=jnp.int32) * 5 + 2) % N
    dst = (jnp.arange(E, dtype=jnp.int32) * 3 + 1) % N

    out = graph_nn_forward(feature, efeature, nweight, nbias, eweight, ebias, src, dst)
    out = jax.block_until_ready(out)

    ref = _reference(feature, efeature, nweight, nbias, eweight, ebias, src, dst)
    assert out.shape == (N, D)
    # bf16 linears / bf16 messages -> relaxed tolerance vs the f32 reference.
    assert jnp.allclose(out, ref, atol=2e-2, rtol=2e-2), "mismatch vs reference"

    print("KERNEL_OK")
</pallas_src>

<mosaic_0001>
module attributes {stable_mosaic.version = 11 : i64} {
  func.func @_node_linear_kernel(%arg0: i32, %arg1: memref<16x128xbf16, #tpu.memory_space<vmem>>, %arg2: memref<128x128xbf16, #tpu.memory_space<vmem>>, %arg3: memref<1x128xf32, #tpu.memory_space<vmem>>, %arg4: memref<16x128xbf16, #tpu.memory_space<vmem>>) attributes {dimension_semantics = [#tpu.dimension_semantics<parallel>], iteration_bounds = array<i64: 1>, scalar_prefetch = 0 : i64, scratch_operands = 0 : i64, tpu.core_type = #tpu.core_type<tc>, window_params = [{transform_indices = @transform_0, window_bounds = array<i64: 16, 128>}, {pipeline_mode = #tpu.pipeline_mode<synchronous>, transform_indices = @transform_1, window_bounds = array<i64: 128, 128>}, {pipeline_mode = #tpu.pipeline_mode<synchronous>, transform_indices = @transform_2, window_bounds = array<i64: 1, 128>}, {transform_indices = @transform_3, window_bounds = array<i64: 16, 128>}]} {
    %c0 = arith.constant 0 : index
    %c0_0 = arith.constant 0 : index
    %0 = vector.load %arg1[%c0, %c0_0] : memref<16x128xbf16, #tpu.memory_space<vmem>>, vector<16x128xbf16>
    %c0_1 = arith.constant 0 : index
    %c0_2 = arith.constant 0 : index
    %1 = vector.load %arg2[%c0_1, %c0_2] : memref<128x128xbf16, #tpu.memory_space<vmem>>, vector<128x128xbf16>
    %cst = arith.constant dense<0.000000e+00> : vector<16x128xf32>
    %2 = tpu.matmul %0, %1, %cst {dimension_numbers = #tpu.dot_dimension_numbers<[1], [0], [0], [1], [0, 0, 1, 1], [], []>} : vector<16x128xbf16>, vector<128x128xbf16>, vector<16x128xf32> -> vector<16x128xf32>
    %c0_3 = arith.constant 0 : index
    %c0_4 = arith.constant 0 : index
    %3 = vector.load %arg3[%c0_3, %c0_4] : memref<1x128xf32, #tpu.memory_space<vmem>>, vector<1x128xf32>
    %4 = vector.broadcast %3 : vector<1x128xf32> to vector<16x128xf32>
    %5 = arith.addf %2, %4 : vector<16x128xf32>
    %cst_5 = arith.constant 0.000000e+00 : f32
    %6 = vector.broadcast %cst_5 : f32 to vector<16x128xf32>
    %7 = arith.maximumf %5, %6 : vector<16x128xf32>
    %8 = arith.truncf %7 : vector<16x128xf32> to vector<16x128xbf16>
    %c0_6 = arith.constant 0 : index
    %c0_7 = arith.constant 0 : index
    %9 = vector.load %arg4[%c0_6, %c0_7] : memref<16x128xbf16, #tpu.memory_space<vmem>>, vector<16x128xbf16>
    tpu.vector_store %arg4[%c0_6, %c0_7], %8 {strides = array<i32>} : memref<16x128xbf16, #tpu.memory_space<vmem>>, vector<16x128xbf16>,
    return
  }
  func.func @transform_0(%arg0: i32) -> (i32, i32) {
    %c0_i32 = arith.constant 0 : i32
    %c0_i32_0 = arith.constant 0 : i32
    return %arg0, %c0_i32 : i32, i32
  }
  func.func @transform_1(%arg0: i32) -> (i32, i32) {
    %c0_i32 = arith.constant 0 : i32
    %c0_i32_0 = arith.constant 0 : i32
    %c0_i32_1 = arith.constant 0 : i32
    return %c0_i32, %c0_i32_0 : i32, i32
  }
  func.func @transform_2(%arg0: i32) -> (i32, i32) {
    %c0_i32 = arith.constant 0 : i32
    %c0_i32_0 = arith.constant 0 : i32
    %c0_i32_1 = arith.constant 0 : i32
    return %c0_i32, %c0_i32_0 : i32, i32
  }
  func.func @transform_3(%arg0: i32) -> (i32, i32) {
    %c0_i32 = arith.constant 0 : i32
    %c0_i32_0 = arith.constant 0 : i32
    return %arg0, %c0_i32 : i32, i32
  }
}

</mosaic_0001>

<llo_original>
// kernel: tpu_custom_call.1
$region0: #{tpu_custom_call.1}
  #allocation0 [shape = 'u32[]', space=smem, size = 0x4, offset = 0x4, fixed_abs, tag = 'smem constant byte address 0x4 - core index']
  #allocation1 [shape = 'u32[144,128]{1,0:T(1,128)}', space=vmem, size = 0x12000, scoped, tag = 'internal scratch']
  %s0 = inlined_call_operand.hbm [shape: bf16[16,128], index: 0, kind: input, shape index: {}]
  %s1 = inlined_call_operand.hbm [shape: bf16[128,128], index: 1, kind: input, shape index: {}]
  %s2 = inlined_call_operand.vmem [shape: f32[1,128], index: 2, kind: input, shape index: {}]
  %s3 = inlined_call_operand.hbm [shape: bf16[16,128], index: 3, kind: output, shape index: {}]
  %s4 = sld [smem:[#allocation0]]
  $region30: #{tpu_custom_call.1} parent=0
    _
  %s6 = ssub.s32 1, %s4
  %s7 = scalar_select 0, %s6, %s4
  $region1: #{tpu_custom_call.1} parent=0
    #allocation2 [shape = 'u8[4096]{0}', space=vmem, size = 0x1000, scoped, tag = 'input window, operand 0, single buffered']
    #allocation3 [shape = 's32[1]{0}', space=sflag, size = 0x4, scoped, tag = 'scoped memory for tpu_custom_call.1']
    #allocation4 [shape = 's32[1]{0}', space=sflag, size = 0x4, scoped, tag = 'scoped memory for tpu_custom_call.1']
    #allocation5 [shape = 'u8[32768]{0}', space=vmem, size = 0x8000, scoped, tag = 'input window, operand 1, single buffered']
    #allocation6 [shape = 's32[1]{0}', space=sflag, size = 0x4, scoped, tag = 'scoped memory for tpu_custom_call.1']
    #allocation7 [shape = 'u8[4096]{0}', space=vmem, size = 0x1000, scoped, tag = 'output window, operand 0, single buffered']
    %8 = vsyncpa [#allocation3], 0
    %9 = vsyncpa [#allocation6], 0
    %10 = vsyncpa [#allocation4], 0
    // Predicated region
    $region2: #{tpu_custom_call.1} parent=1 // pred_check
      _
    $region3: #{tpu_custom_call.1} parent=1 // pred_check_branch
      %12 = sbr.rel (0) target = $region5
    $region4: #{tpu_custom_call.1} parent=1 // pred_region
      %s14 = ssub.s32 128, 128
      %15 = vsyncadd [#allocation3], %s14
      %s16 = sshll.u32 [#allocation2], 4
      %s17 = int_to_ptr.vmem [resolvable:$true] %s16
      %22 = dma.hbm_to_vmem [thread:$0]  %s0, 128, %s17, [#allocation3], 64, 64, 4
    $region5: #{tpu_custom_call.1} parent=1 // pred_fallthru
      _
    // Predicated region
    $region6: #{tpu_custom_call.1} parent=1 // pred_check
      _
    $region7: #{tpu_custom_call.1} parent=1 // pred_check_branch
      %24 = sbr.rel (0) target = $region9
    $region8: #{tpu_custom_call.1} parent=1 // pred_region
      %s26 = ssub.s32 1024, 1024
      %27 = vsyncadd [#allocation6], %s26
      %s28 = sshll.u32 [#allocation5], 4
      %s29 = int_to_ptr.vmem [resolvable:$true] %s28
      %34 = dma.hbm_to_vmem [thread:$0]  %s1, 1024, %s29, [#allocation6], 64, 64, 4
    $region9: #{tpu_custom_call.1} parent=1 // pred_fallthru
      _
    // Predicated region
    $region10: #{tpu_custom_call.1} parent=1 // pred_check
      _
    $region11: #{tpu_custom_call.1} parent=1 // pred_check_branch
      %36 = sbr.rel (0) target = $region13
    $region12: #{tpu_custom_call.1} parent=1 // pred_region
      _
    $region13: #{tpu_custom_call.1} parent=1 // pred_fallthru
      _
    // Predicated region
    $region14: #{tpu_custom_call.1} parent=1 // pred_check
      _
    $region15: #{tpu_custom_call.1} parent=1 // pred_check_branch
      %38 = sbr.rel (0) target = $region17
    $region16: #{tpu_custom_call.1} parent=1 // pred_region
      %39 = dma.done [#allocation3], 128
    $region17: #{tpu_custom_call.1} parent=1 // pred_fallthru
      _
    // Predicated region
    $region18: #{tpu_custom_call.1} parent=1 // pred_check
      _
    $region19: #{tpu_custom_call.1} parent=1 // pred_check_branch
      %41 = sbr.rel (0) target = $region21
    $region20: #{tpu_custom_call.1} parent=1 // pred_region
      %42 = dma.done [#allocation6], 1024
    $region21: #{tpu_custom_call.1} parent=1 // pred_fallthru
      _
    %v44 = vld [vmem:[#allocation2] sm:$0xf]
    %v45 = vld [vmem:[#allocation2 + $0x4] sm:$0xf]
    %v46 = vld [vmem:[#allocation5] sm:$0xf]
    %v47 = vld [vmem:[#allocation5 + $0x4] sm:$0xf]
    %v48 = vld [vmem:[#allocation5 + $0x8] sm:$0xf]
    %v49 = vld [vmem:[#allocation5 + $0xc] sm:$0xf]
    %v50 = vld [vmem:[#allocation5 + $0x10] sm:$0xf]
    %v51 = vld [vmem:[#allocation5 + $0x14] sm:$0xf]
    %v52 = vld [vmem:[#allocation5 + $0x18] sm:$0xf]
    %v53 = vld [vmem:[#allocation5 + $0x1c] sm:$0xf]
    %v54 = vld [vmem:[#allocation5 + $0x20] sm:$0xf]
    %v55 = vld [vmem:[#allocation5 + $0x24] sm:$0xf]
    %v56 = vld [vmem:[#allocation5 + $0x28] sm:$0xf]
    %v57 = vld [vmem:[#allocation5 + $0x2c] sm:$0xf]
    %v58 = vld [vmem:[#allocation5 + $0x30] sm:$0xf]
    %v59 = vld [vmem:[#allocation5 + $0x34] sm:$0xf]
    %v60 = vld [vmem:[#allocation5 + $0x38] sm:$0xf]
    %v61 = vld [vmem:[#allocation5 + $0x3c] sm:$0xf]
    %v62 = vld [vmem:[%s2] sm:$0x1]
    %v64 = vlaneseq
    %v65 = vshrl.u32 %v64, 7
    %v66 = vsub.s32 0, %v65
    %v67 = vrot.slane %v62, %v66
    %v71 = vunpack.c.l.b16 %v44
    %v72 = vunpack.c.l.b16 %v45
    %v73 = vpack.c.b16 %v72, %v71
    %v91 = vunpack.c.l.b16 %v46
    %v92 = vunpack.c.l.b16 %v47
    %v93 = vunpack.c.l.b16 %v48
    %v94 = vunpack.c.l.b16 %v49
    %v95 = vunpack.c.l.b16 %v50
    %v96 = vunpack.c.l.b16 %v51
    %v97 = vunpack.c.l.b16 %v52
    %v98 = vunpack.c.l.b16 %v53
    %v99 = vunpack.c.l.b16 %v54
    %v100 = vunpack.c.l.b16 %v55
    %v101 = vunpack.c.l.b16 %v56
    %v102 = vunpack.c.l.b16 %v57
    %v103 = vunpack.c.l.b16 %v58
    %v104 = vunpack.c.l.b16 %v59
    %v105 = vunpack.c.l.b16 %v60
    %v106 = vunpack.c.l.b16 %v61
    %v107 = vpack.c.b16 %v92, %v91
    %v108 = vpack.c.b16 %v94, %v93
    %v109 = vpack.c.b16 %v96, %v95
    %v110 = vpack.c.b16 %v98, %v97
    %v111 = vpack.c.b16 %v100, %v99
    %v112 = vpack.c.b16 %v102, %v101
    %v113 = vpack.c.b16 %v104, %v103
    %v114 = vpack.c.b16 %v106, %v105
    %123 = vmatprep.subr.bf16.mxu0 0
    %124 = vmatpush1.bf16.msra.mxu0 %v107
    %125 = vmatprep.subr.bf16.mxu0 0
    %126 = vmatpush1.bf16.msra.mxu0 %v108
    %127 = vmatprep.subr.bf16.mxu0 0
    %128 = vmatpush1.bf16.msra.mxu0 %v109
    %129 = vmatprep.subr.bf16.mxu0 0
    %130 = vmatpush1.bf16.msra.mxu0 %v110
    %131 = vmatprep.subr.bf16.mxu0 0
    %132 = vmatpush1.bf16.msra.mxu0 %v111
    %133 = vmatprep.subr.bf16.mxu0 0
    %134 = vmatpush1.bf16.msra.mxu0 %v112
    %135 = vmatprep.subr.bf16.mxu0 0
    %136 = vmatpush1.bf16.msra.mxu0 %v113
    %137 = vmatprep.subr.bf16.mxu0 0
    %138 = vmatpush1.bf16.msra.mxu0 %v114
    %139 = vmatprep.subr.bf16.mxu0 0
    %140 = vmatpush1.bf16.msra.mxu0 0
    %141 = vmatprep.subr.bf16.mxu0 0
    %142 = vmatpush1.bf16.msra.mxu0 0
    %143 = vmatprep.subr.bf16.mxu0 0
    %144 = vmatpush1.bf16.msra.mxu0 0
    %145 = vmatprep.subr.bf16.mxu0 0
    %146 = vmatpush1.bf16.msra.mxu0 0
    %147 = vmatprep.subr.bf16.mxu0 0
    %148 = vmatpush1.bf16.msra.mxu0 0
    %149 = vmatprep.subr.bf16.mxu0 0
    %150 = vmatpush1.bf16.msra.mxu0 0
    %151 = vmatprep.subr.bf16.mxu0 0
    %152 = vmatpush1.bf16.msra.mxu0 0
    %153 = vmatprep.subr.bf16.mxu0 0
    %154 = vmatpush1.bf16.msra.mxu0 0
    %155 = vmatprep.mubr.bf16.mxu0 0
    %156 = vmatmul.mubr.bf16.gmra.mrb[0].mxu0 %v73
    %v157 = vpop.f32.mrb[0].mxu0
    %v158 = vadd.f32 %v67, %v157
    %v159 = vpop.f32.mrb[0].mxu0
    %v160 = vpop.f32.mrb[0].mxu0
    %v161 = vadd.f32 %v67, %v160
    %v162 = vpop.f32.mrb[0].mxu0
    %163 = vdwg.mxu0
    %v164 = vmax.f32 %v158, 0.0
    %v165 = vmax.f32 %v161, 0.0
    %v166 = vpack.c.bf16 %v165, %v164
    %v168 = vunpack.c.l.b16 %v166
    %v169 = vunpack.c.h.b16 %v166
    %v170 = vpack.c.b16 %v168, %v168
    %v171 = vpack.c.b16 %v169, %v169
    %174 = vst [vmem:[#allocation7] sm:$0xf] %v170
    %175 = vst [vmem:[#allocation7 + $0x4] sm:$0xf] %v171
    // Predicated region
    $region22: #{tpu_custom_call.1} parent=1 // pred_check
      _
    $region23: #{tpu_custom_call.1} parent=1 // pred_check_branch
      %177 = sbr.rel (0) target = $region25
    $region24: #{tpu_custom_call.1} parent=1 // pred_region
      %s179 = ssub.s32 128, 128
      %180 = vsyncadd [#allocation4], %s179
      %s181 = sshll.u32 [#allocation7], 4
      %s182 = int_to_ptr.vmem [resolvable:$true] %s181
      %187 = dma.vmem_to_hbm [thread:$0]  %s182, 128, %s3, [#allocation4], 64, 64, 4
    $region25: #{tpu_custom_call.1} parent=1 // pred_fallthru
      _
    // Predicated region
    $region26: #{tpu_custom_call.1} parent=1 // pred_check
      _
    $region27: #{tpu_custom_call.1} parent=1 // pred_check_branch
      %189 = sbr.rel (0) target = $region29
    $region28: #{tpu_custom_call.1} parent=1 // pred_region
      %190 = dma.done [#allocation4], 128
    $region29: #{tpu_custom_call.1} parent=1 // pred_fallthru
      _
    %191 = vsyncpa [#allocation3], 1
    %192 = vsyncpa [#allocation6], 1
    %193 = vsyncpa [#allocation4], 1

</llo_original>
